<compile_context>
chip_gen: v5e
topology: v5e:2x2
jax: 0.10.0
libtpu: 0.0.40
codegen_flags: <defaults>
</compile_context>

<pallas_src>
import jax
import jax.numpy as jnp
from jax.experimental import pallas as pl
from jax.experimental.pallas import tpu as pltpu


def _dma_slice_kernel(emb_hbm, out_hbm, copy_sem):
    # Output rows [0, seq_len) == table rows [0, seq_len): one contiguous
    # HBM->HBM async copy does the whole forward pass.  Lane-width of d_model
    # is irrelevant here (no vector stores), so narrow d_model (e.g. 32) does
    # not hit the masked-vst penalty the tiled-copy variant had.
    seq_len = out_hbm.shape[0]
    cp = pltpu.make_async_copy(
        emb_hbm.at[pl.ds(0, seq_len), :],  # static, contiguous row range
        out_hbm,
        copy_sem,
    )
    cp.start()
    cp.wait()


def trainable_position_encoding(weight: jax.Array, seq_len: int):
    """Equivalent of TrainablePositionEncoding.forward(seq_len).

    weight: (max_sequence_length, d_model) embedding table.
    Returns (1, seq_len, d_model) == weight[arange(seq_len)][None, :, :].

    NOTE: for a pure slice like this, `weight[:seq_len][None]` in plain JAX
    lets XLA fuse it into the consumer and is the true optimum; the Pallas
    kernel below is the best a standalone custom call can do (single DMA).
    """
    max_len, d_model = weight.shape
    assert 0 < seq_len <= max_len, "seq_len must not exceed the embedding table size"

    itemsize = jnp.dtype(weight.dtype).itemsize
    out_shape = jax.ShapeDtypeStruct((seq_len, d_model), weight.dtype)

    f = pl.pallas_call(
        _dma_slice_kernel,
        out_shape=out_shape,
        # No grid: a single invocation issues one DMA covering all
        # seq_len * d_model bytes read + written.
        in_specs=[pl.BlockSpec(memory_space=pl.ANY)],   # table stays in HBM
        out_specs=pl.BlockSpec(memory_space=pl.ANY),    # output written by DMA
        scratch_shapes=[pltpu.SemaphoreType.DMA(())],
        # Advisory hint so XLA can overlap this trivially mem-bound call with
        # neighboring compute instead of serializing around it.
        cost_estimate=pl.CostEstimate(
            flops=0,
            transcendentals=0,
            bytes_accessed=2 * seq_len * d_model * itemsize,
        ),
    )
    out2d = f(weight)
    # Batch dim added in the wrapper (free layout plumbing) to match the
    # (1, seq_len, d_model) shape PyTorch's module returns.
    return out2d[None, :, :]


if __name__ == "__main__":
    # Small shapes consistent with the module: Embedding(max_sequence_length, d_model).
    max_sequence_length = 64
    d_model = 32
    seq_len = 24

    # NOTE: the PyTorch module zero-initializes the embedding weight
    # (nn.init.constant_(..., 0.0)).  A deterministic random table is used here
    # so the copy is actually exercised; set `weight = jnp.zeros(...)` to match
    # the literal initialization.
    key = jax.random.PRNGKey(0)
    weight = jax.random.normal(key, (max_sequence_length, d_model), dtype=jnp.float32)

    out = trainable_position_encoding(weight, seq_len)
    out = jax.block_until_ready(out)

    # Reference: embedding lookup of arange(seq_len).unsqueeze(0)
    ref = weight[jnp.arange(seq_len)][None, :, :]

    assert out.shape == (1, seq_len, d_model), out.shape
    assert out.dtype == weight.dtype, out.dtype
    assert jnp.allclose(out, ref), "Pallas DMA slice-copy does not match reference"

    print("KERNEL_OK")
</pallas_src>

<mosaic_0001>
module attributes {stable_mosaic.version = 11 : i64} {
  func.func @_dma_slice_kernel(%arg0: memref<64x32xf32, #tpu.memory_space<any>>, %arg1: memref<24x32xf32, #tpu.memory_space<any>>, %arg2: memref<!tpu.dma_semaphore, #tpu.memory_space<semaphore_mem>>) attributes {dimension_semantics = [], scalar_prefetch = 0 : i64, scratch_operands = 1 : i64, tpu.core_type = #tpu.core_type<tc>} {
    %c0_i32 = arith.constant 0 : i32
    %c0_i32_0 = arith.constant 0 : i32
    %0 = tpu.memref_slice %arg0[%c0_i32, %c0_i32_0] : memref<64x32xf32, #tpu.memory_space<any>> -> memref<24x32xf32, #tpu.memory_space<any>>
    tpu.enqueue_dma source(%0 : memref<24x32xf32, #tpu.memory_space<any>>) target(%arg1 : memref<24x32xf32, #tpu.memory_space<any>>) target_semaphore(%arg2 : memref<!tpu.dma_semaphore, #tpu.memory_space<semaphore_mem>>)
    %c0_i32_1 = arith.constant 0 : i32
    %c0_i32_2 = arith.constant 0 : i32
    %1 = tpu.memref_slice %arg0[%c0_i32_1, %c0_i32_2] : memref<64x32xf32, #tpu.memory_space<any>> -> memref<24x32xf32, #tpu.memory_space<any>>
    tpu.wait_dma2 semaphore(%arg2 : memref<!tpu.dma_semaphore, #tpu.memory_space<semaphore_mem>>) src(%1 : memref<24x32xf32, #tpu.memory_space<any>>) dst(%arg1 : memref<24x32xf32, #tpu.memory_space<any>>)
    return
  }
}

</mosaic_0001>

<llo_original>
// kernel: tpu_custom_call.1
$region0: #{tpu_custom_call.1}
  #allocation0 [shape = 'u32[]', space=smem, size = 0x4, offset = 0x4, fixed_abs, tag = 'smem constant byte address 0x4 - core index']
  #allocation1 [shape = 'u32[72,128]{1,0:T(1,128)}', space=vmem, size = 0x9000, scoped, tag = 'internal scratch']
  #allocation2 [shape = 's32[1]{0}', space=sflag, size = 0x4, scoped, tag = 'scratch operand']
  #allocation3 [shape = 's32[]', space=sflag, size = 0x4, offset = 0, fixed_abs, tag = 'sflag constant byte address 0x0 - dummy sync flag']
  #allocation4 [shape = 's32[]', space=sflag, size = 0x4, offset = 0, fixed_abs, tag = 'sflag constant byte address 0x0 - dummy sync flag']
  #allocation5 [shape = 'u32[]', space=smem, size = 0x4, offset = 0x44, fixed_abs, tag = 'smem constant byte address 0x44 - assertion arg 0']
  #allocation6 [shape = 'u32[]', space=smem, size = 0x4, offset = 0x48, fixed_abs, tag = 'smem constant byte address 0x48 - assertion arg 1']
  %s0 = inlined_call_operand.vmem [shape: f32[64,32], index: 0, kind: input, shape index: {}]
  %s1 = inlined_call_operand.hbm [shape: f32[24,32], index: 1, kind: output, shape index: {}]
  %s2 = sld [smem:[#allocation0]]
  $region6: #{tpu_custom_call.1} parent=0
    _
  %s4 = ssub.s32 1, %s2
  %s5 = scalar_select 0, %s4, %s2
  // Predicated region
  $region2: #{tpu_custom_call.1} parent=0 // pred_check
    _
  $region3: #{tpu_custom_call.1} parent=0 // pred_check_branch
    %7 = sbr.rel target = $region5
  $region4: #{tpu_custom_call.1} parent=0 // pred_region
    %8 = sst [smem:[#allocation5]] [#allocation4]
    %9 = sst [smem:[#allocation6]] [#allocation3]
  $region5: #{tpu_custom_call.1} parent=0 // pred_fallthru
    _
  %11 = shalt.err (0)
  %s13 = sshll.u32 %s0, 4
  %s14 = int_to_ptr.vmem [resolvable:$true] %s13
  %s15 = sshll.u32 %s1, 4
  %s16 = int_to_ptr.hbm [resolvable:$true] %s15
  %18 = dma.vmem_to_hbm [thread:$0]  %s14, 384, %s16, [#allocation2]
  %s19 = smul.u32 24, 1
  %s20 = sshll.u32 %s19, 4
  %21 = dma.done [#allocation2], %s20
  %22 = vsyncmov [#allocation2]
  %s23 = vpop.sfrf %22
  %p24 = scmp.eq.s32.totalorder %s23, 0
  %p25 = pneg %p24
  %27 = shalt.err (%p25)

</llo_original>
